<compile_context>
chip_gen: v5e
topology: v5e:2x2
jax: 0.10.0
libtpu: 0.0.40
codegen_flags: <defaults>
</compile_context>

<pallas_src>
import jax
import jax.numpy as jnp
from jax.experimental import pallas as pl
from jax.experimental.pallas import tpu as pltpu


_MAX_ROW_TILE = 2048       # measured: >=512-row tiles already at ~85% HBM roofline
_TARGET_GRID_STEPS = 8     # >= 4 pipeline stages per TensorCore on v7x
_TILE_FLOOR_ROWS = 512     # don't shrink tiles below this chasing step count


def _rms_norm_kernel(x_ref, w_ref, o_ref):
    # x_ref: (TILE_ROWS, D) input dtype, w_ref: (1, D) f32, o_ref: (TILE_ROWS, D).
    # Tail-block rows beyond the real row count hold unspecified data; that is
    # safe because the mean is per-row and their stores are masked by Pallas.
    x = x_ref[...].astype(jnp.float32)
    inv_rms = jax.lax.rsqrt(jnp.mean(x * x, axis=-1, keepdims=True) + 1e-6)
    o_ref[...] = (x * inv_rms * w_ref[...]).astype(o_ref.dtype)


def _sublane_granularity(dtype) -> int:
    # f32 -> 8, bf16/f16 -> 16, int8/fp8 -> 32 (sub-32-bit dtypes pack along sublanes).
    itemsize = jnp.dtype(dtype).itemsize
    return max(8, 32 // max(itemsize, 1))


def _round_up(x: int, m: int) -> int:
    return ((x + m - 1) // m) * m


def _vmem_params():
    """Generation-aware (tile budget, scoped vmem limit) in bytes."""
    cap = None
    try:
        cap = getattr(pltpu.get_tpu_info(), "vmem_capacity_bytes", None)
    except Exception:
        cap = None
    if not cap:
        cap = 64 * 1024 * 1024  # conservative fallback: v7x per-TensorCore VMEM
    limit = int(cap) * 3 // 4   # leave >= 25% physical headroom for compiler temps
    budget = limit // 2         # live working set target (incl. double-buffering)
    return budget, limit


def _pick_row_tile(rows: int, dim: int, dtype, vmem_budget: int) -> int:
    """Row tile sized from the VMEM budget, aligned to sublane packing,
    targeting >= 8 (even) grid steps but never below ~512 rows."""
    g = _sublane_granularity(dtype)
    itemsize = jnp.dtype(dtype).itemsize
    # Double-buffered input + output tiles plus ~12 B/elem of live f32
    # temporaries (x_f32, x*x / product) inside the body.
    per_row_bytes = dim * (2 * itemsize + 2 * itemsize + 12)
    vmem_tile = (vmem_budget // per_row_bytes) // g * g
    vmem_tile = max(g, min(vmem_tile, _MAX_ROW_TILE))

    rows_g = _round_up(rows, g)
    vmem_tile = min(vmem_tile, rows_g)  # never a tile bigger than the data

    floor_rows = max(g, min(_TILE_FLOOR_ROWS, vmem_tile))
    target = _round_up(pl.cdiv(rows_g, _TARGET_GRID_STEPS), g)
    tr = max(floor_rows, min(vmem_tile, target))

    # Prefer an even step count (v7x shards the parallel axis across 2 TCs);
    # best-effort: try one more step if it makes the count even.
    steps = pl.cdiv(rows, tr)
    if steps > 1 and steps % 2 == 1:
        tr_even = max(floor_rows, _round_up(pl.cdiv(rows_g, steps + 1), g))
        if tr_even >= g and pl.cdiv(rows, tr_even) % 2 == 0:
            tr = tr_even
    return tr


def rms_norm(x: jax.Array, scale: jax.Array) -> jax.Array:
    """RMSNorm over the last axis of x, weighted by `scale` (shape (dim,))."""
    orig_shape = x.shape
    dim = orig_shape[-1]
    assert scale.shape == (dim,)

    rows = 1
    for s in orig_shape[:-1]:
        rows *= s
    x2d = x.reshape(rows, dim)

    vmem_budget, vmem_limit = _vmem_params()
    tr = _pick_row_tile(rows, dim, x.dtype, vmem_budget)

    # Ragged last block is handled by Pallas masking: no HBM pad / slice copies.
    grid = (pl.cdiv(rows, tr),)

    # Cast the weight once here; the kernel body stays a pure fused multiply.
    w2d = scale.astype(jnp.float32).reshape(1, dim)

    out = pl.pallas_call(
        _rms_norm_kernel,
        out_shape=jax.ShapeDtypeStruct((rows, dim), x.dtype),
        grid_spec=pltpu.PrefetchScalarGridSpec(
            num_scalar_prefetch=0,
            grid=grid,
            in_specs=[
                pl.BlockSpec((tr, dim), lambda i: (i, 0)),
                pl.BlockSpec((1, dim), lambda i: (0, 0)),  # constant: DMAed once
            ],
            out_specs=pl.BlockSpec((tr, dim), lambda i: (i, 0)),
        ),
        compiler_params=pltpu.CompilerParams(
            dimension_semantics=("parallel",),
            vmem_limit_bytes=vmem_limit,
        ),
    )(x2d, w2d)

    return out.reshape(orig_shape)


def rms_norm_ref(x, scale, eps=1e-6):
    xf = x.astype(jnp.float32)
    r = xf * jax.lax.rsqrt(jnp.mean(xf * xf, axis=-1, keepdims=True) + eps)
    return (r * scale.astype(jnp.float32)).astype(x.dtype)


if __name__ == "__main__":
    key = jax.random.PRNGKey(0)
    kx, kw, kx2 = jax.random.split(key, 3)

    # Primary case: (batch, seq, dim) f32.
    batch, seq, dim = 2, 8, 128
    x = jax.random.normal(kx, (batch, seq, dim), dtype=jnp.float32)
    scale = jax.random.normal(kw, (dim,), dtype=jnp.float32)

    out = jax.block_until_ready(rms_norm(x, scale))
    ref = rms_norm_ref(x, scale)
    assert out.shape == x.shape and out.dtype == x.dtype
    assert jnp.allclose(out, ref, atol=1e-5, rtol=1e-5), "f32 mismatch vs reference"

    # Odd row count (rows=15) -> exercises the ragged (masked) last block path.
    x_odd = jax.random.normal(kx2, (3, 5, dim), dtype=jnp.float32)
    out_odd = jax.block_until_ready(rms_norm(x_odd, scale))
    ref_odd = rms_norm_ref(x_odd, scale)
    assert out_odd.shape == x_odd.shape
    assert jnp.allclose(out_odd, ref_odd, atol=1e-5, rtol=1e-5), "ragged-block mismatch"

    # bf16 input -> exercises the 16-row sublane-packing granularity.
    x_bf = x.astype(jnp.bfloat16)
    out_bf = jax.block_until_ready(rms_norm(x_bf, scale))
    ref_bf = rms_norm_ref(x_bf, scale)
    assert out_bf.dtype == jnp.bfloat16
    assert jnp.allclose(out_bf.astype(jnp.float32), ref_bf.astype(jnp.float32),
                        atol=5e-2, rtol=5e-2), "bf16 mismatch"

    print("KERNEL_OK")
</pallas_src>

<mosaic_0001>
module attributes {stable_mosaic.version = 11 : i64} {
  func.func @_rms_norm_kernel(%arg0: i32, %arg1: memref<16x128xf32, #tpu.memory_space<vmem>>, %arg2: memref<1x128xf32, #tpu.memory_space<vmem>>, %arg3: memref<16x128xf32, #tpu.memory_space<vmem>>) attributes {dimension_semantics = [#tpu.dimension_semantics<parallel>], iteration_bounds = array<i64: 1>, scalar_prefetch = 0 : i64, scratch_operands = 0 : i64, tpu.core_type = #tpu.core_type<tc>, window_params = [{transform_indices = @transform_0, window_bounds = array<i64: 16, 128>}, {pipeline_mode = #tpu.pipeline_mode<synchronous>, transform_indices = @transform_1, window_bounds = array<i64: 1, 128>}, {transform_indices = @transform_2, window_bounds = array<i64: 16, 128>}]} {
    %c0 = arith.constant 0 : index
    %c0_0 = arith.constant 0 : index
    %0 = vector.load %arg1[%c0, %c0_0] : memref<16x128xf32, #tpu.memory_space<vmem>>, vector<16x128xf32>
    %1 = arith.mulf %0, %0 : vector<16x128xf32>
    %cst = arith.constant dense<0.000000e+00> : vector<16xf32>
    %2 = vector.multi_reduction <add>, %1, %cst [1] : vector<16x128xf32> to vector<16xf32>
    %3 = vector.shape_cast %2 : vector<16xf32> to vector<16x1xf32>
    %cst_1 = arith.constant 1.280000e+02 : f32
    %4 = vector.broadcast %cst_1 : f32 to vector<16x1xf32>
    %5 = arith.divf %3, %4 : vector<16x1xf32>
    %cst_2 = arith.constant 9.99999997E-7 : f32
    %6 = vector.broadcast %cst_2 : f32 to vector<16x1xf32>
    %7 = arith.addf %5, %6 : vector<16x1xf32>
    %8 = math.rsqrt %7 : vector<16x1xf32>
    %9 = vector.broadcast %8 : vector<16x1xf32> to vector<16x128xf32>
    %10 = arith.mulf %0, %9 : vector<16x128xf32>
    %c0_3 = arith.constant 0 : index
    %c0_4 = arith.constant 0 : index
    %11 = vector.load %arg2[%c0_3, %c0_4] : memref<1x128xf32, #tpu.memory_space<vmem>>, vector<1x128xf32>
    %12 = vector.broadcast %11 : vector<1x128xf32> to vector<16x128xf32>
    %13 = arith.mulf %10, %12 : vector<16x128xf32>
    %c0_5 = arith.constant 0 : index
    %c0_6 = arith.constant 0 : index
    %14 = vector.load %arg3[%c0_5, %c0_6] : memref<16x128xf32, #tpu.memory_space<vmem>>, vector<16x128xf32>
    tpu.vector_store %arg3[%c0_5, %c0_6], %13 {strides = array<i32>} : memref<16x128xf32, #tpu.memory_space<vmem>>, vector<16x128xf32>,
    return
  }
  func.func @transform_0(%arg0: i32) -> (i32, i32) {
    %c0_i32 = arith.constant 0 : i32
    %c0_i32_0 = arith.constant 0 : i32
    return %arg0, %c0_i32 : i32, i32
  }
  func.func @transform_1(%arg0: i32) -> (i32, i32) {
    %c0_i32 = arith.constant 0 : i32
    %c0_i32_0 = arith.constant 0 : i32
    %c0_i32_1 = arith.constant 0 : i32
    return %c0_i32, %c0_i32_0 : i32, i32
  }
  func.func @transform_2(%arg0: i32) -> (i32, i32) {
    %c0_i32 = arith.constant 0 : i32
    %c0_i32_0 = arith.constant 0 : i32
    return %arg0, %c0_i32 : i32, i32
  }
}

</mosaic_0001>

<llo_original>
// kernel: tpu_custom_call.1
$region0: #{tpu_custom_call.1}
  #allocation0 [shape = 'u32[]', space=smem, size = 0x4, offset = 0x4, fixed_abs, tag = 'smem constant byte address 0x4 - core index']
  #allocation1 [shape = 'u32[72,128]{1,0:T(1,128)}', space=vmem, size = 0x9000, scoped, tag = 'internal scratch']
  %s0 = inlined_call_operand.hbm [shape: f32[16,128], index: 0, kind: input, shape index: {}]
  %s1 = inlined_call_operand.hbm [shape: f32[1,128], index: 1, kind: input, shape index: {}]
  %s2 = inlined_call_operand.hbm [shape: f32[16,128], index: 2, kind: output, shape index: {}]
  %s3 = sld [smem:[#allocation0]]
  $region26: #{tpu_custom_call.1} parent=0
    _
  %s5 = ssub.s32 1, %s3
  %s6 = scalar_select 0, %s5, %s3
  $region1: #{tpu_custom_call.1} parent=0
    #allocation2 [shape = 'u8[8192]{0}', space=vmem, size = 0x2000, scoped, tag = 'input window, operand 0, single buffered']
    #allocation3 [shape = 's32[1]{0}', space=sflag, size = 0x4, scoped, tag = 'scoped memory for tpu_custom_call.1']
    #allocation4 [shape = 's32[1]{0}', space=sflag, size = 0x4, scoped, tag = 'scoped memory for tpu_custom_call.1']
    #allocation5 [shape = 'u8[512]{0}', space=vmem, size = 0x400, scoped, tag = 'input window, operand 1, single buffered']
    #allocation6 [shape = 's32[1]{0}', space=sflag, size = 0x4, scoped, tag = 'scoped memory for tpu_custom_call.1']
    #allocation7 [shape = 'u8[8192]{0}', space=vmem, size = 0x2000, scoped, tag = 'output window, operand 0, single buffered']
    %7 = vsyncpa [#allocation3], 0
    %8 = vsyncpa [#allocation6], 0
    %9 = vsyncpa [#allocation4], 0
    // Predicated region
    $region2: #{tpu_custom_call.1} parent=1 // pred_check
      _
    $region3: #{tpu_custom_call.1} parent=1 // pred_check_branch
      %11 = sbr.rel (0) target = $region5
    $region4: #{tpu_custom_call.1} parent=1 // pred_region
      %13 = vsyncadd [#allocation3], 0
      %s14 = sshll.u32 %s0, 4
      %s15 = int_to_ptr.hbm [resolvable:$true] %s14
      %s16 = sshll.u32 [#allocation2], 4
      %s17 = int_to_ptr.vmem [resolvable:$true] %s16
      %22 = dma.hbm_to_vmem [thread:$0]  %s15, 256, %s17, [#allocation3], 128, 128, 8
    $region5: #{tpu_custom_call.1} parent=1 // pred_fallthru
      _
    // Predicated region
    $region6: #{tpu_custom_call.1} parent=1 // pred_check
      _
    $region7: #{tpu_custom_call.1} parent=1 // pred_check_branch
      %24 = sbr.rel (0) target = $region9
    $region8: #{tpu_custom_call.1} parent=1 // pred_region
      %26 = vsyncadd [#allocation6], 0
      %s28 = sshll.u32 %s1, 4
      %s29 = int_to_ptr.hbm [resolvable:$true] %s28
      %s30 = sshll.u32 [#allocation5], 4
      %s31 = int_to_ptr.vmem [resolvable:$true] %s30
      %33 = dma.hbm_to_vmem [thread:$0]  %s29, 16, %s31, [#allocation6]
    $region9: #{tpu_custom_call.1} parent=1 // pred_fallthru
      _
    // Predicated region
    $region10: #{tpu_custom_call.1} parent=1 // pred_check
      _
    $region11: #{tpu_custom_call.1} parent=1 // pred_check_branch
      %35 = sbr.rel (0) target = $region13
    $region12: #{tpu_custom_call.1} parent=1 // pred_region
      %37 = dma.done [#allocation3], 256
    $region13: #{tpu_custom_call.1} parent=1 // pred_fallthru
      _
    // Predicated region
    $region14: #{tpu_custom_call.1} parent=1 // pred_check
      _
    $region15: #{tpu_custom_call.1} parent=1 // pred_check_branch
      %39 = sbr.rel (0) target = $region17
    $region16: #{tpu_custom_call.1} parent=1 // pred_region
      %41 = dma.done [#allocation6], 16
    $region17: #{tpu_custom_call.1} parent=1 // pred_fallthru
      _
    %v42 = vld [vmem:[#allocation2] sm:$0xff]
    %v43 = vld [vmem:[#allocation2 + $0x8] sm:$0xff]
    %v44 = vmul.f32 %v42, %v42
    %v45 = vmul.f32 %v43, %v43
    %46 = vadd.xlane.f32.xlu0 %v44
    %v47 = vpop.xlane.xlu0 %46
    %48 = vadd.xlane.f32.xlu0 %v45
    %v49 = vpop.xlane.xlu0 %48
    %v50 = vrcp.pop 128.0
    %v51 = vmul.f32 128.0, %v50
    %v52 = vsub.f32 1.0, %v51
    %v53 = vmul.f32 %v50, %v52
    %v54 = vadd.f32 %v50, %v53
    %vm55 = vweird.f32 %v50
    %v56 = vsel %vm55, %v50, %v54
    %v57 = vmul.f32 %v47, %v56
    %v58 = vmul.f32 %v49, %v56
    %v59 = vadd.f32 %v57, 1e-06
    %v60 = vadd.f32 %v58, 1e-06
    %v61 = vrsqrt.pop %v59
    %v62 = vmul.f32 %v61, %v59
    %v63 = vmul.f32 %v62, %v61
    %v64 = vmul.f32 0.5, %v63
    %v65 = vsub.f32 1.5, %v64
    %v66 = vmul.f32 %v61, %v65
    %vm67 = vweird.f32 %v59
    %vm68 = vweird.f32 %v61
    %vm69 = vmor %vm67, %vm68
    %v70 = vsel %vm69, %v61, %v66
    %v71 = vrsqrt.pop %v60
    %v72 = vmul.f32 %v71, %v60
    %v73 = vmul.f32 %v72, %v71
    %v74 = vmul.f32 0.5, %v73
    %v75 = vsub.f32 1.5, %v74
    %v76 = vmul.f32 %v71, %v75
    %vm77 = vweird.f32 %v60
    %vm78 = vweird.f32 %v71
    %vm79 = vmor %vm77, %vm78
    %v80 = vsel %vm79, %v71, %v76
    %v81 = vmul.f32 %v42, %v70
    %v82 = vmul.f32 %v43, %v80
    %v83 = vld [vmem:[#allocation5] sm:$0x1]
    %v85 = vperm.slane %v83, 0
    %v87 = vmul.f32 %v81, %v85
    %v88 = vmul.f32 %v82, %v85
    %89 = vst [vmem:[#allocation7] sm:$0xff] %v87
    %90 = vst [vmem:[#allocation7 + $0x8] sm:$0xff] %v88
    // Predicated region
    $region18: #{tpu_custom_call.1} parent=1 // pred_check
      _
    $region19: #{tpu_custom_call.1} parent=1 // pred_check_branch
      %92 = sbr.rel (0) target = $region21
    $region20: #{tpu_custom_call.1} parent=1 // pred_region
      %94 = vsyncadd [#allocation4], 0
      %s95 = sshll.u32 [#allocation7], 4
      %s96 = int_to_ptr.vmem [resolvable:$true] %s95
      %s97 = sshll.u32 %s2, 4
      %s98 = int_to_ptr.hbm [resolvable:$true] %s97
      %103 = dma.vmem_to_hbm [thread:$0]  %s96, 256, %s98, [#allocation4], 128, 128, 8
    $region21: #{tpu_custom_call.1} parent=1 // pred_fallthru
      _
    // Predicated region
    $region22: #{tpu_custom_call.1} parent=1 // pred_check
      _
    $region23: #{tpu_custom_call.1} parent=1 // pred_check_branch
      %105 = sbr.rel (0) target = $region25
    $region24: #{tpu_custom_call.1} parent=1 // pred_region
      %107 = dma.done [#allocation4], 256
    $region25: #{tpu_custom_call.1} parent=1 // pred_fallthru
      _
    %108 = vsyncpa [#allocation3], 1
    %109 = vsyncpa [#allocation6], 1
    %110 = vsyncpa [#allocation4], 1

</llo_original>
